<compile_context>
chip_gen: v5e
topology: v5e:2x2
jax: 0.10.0
libtpu: 0.0.40
codegen_flags: <defaults>
</compile_context>

<pallas_src>
import jax
import jax.numpy as jnp
import numpy as np
from jax.experimental import pallas as pl
from jax.experimental.pallas import tpu as pltpu


def _concat_rows_kernel(x_ref, xs_ref, o_ref):
    """out[:, :C1] = x ; out[:, C1:] = x_skip   (torch.cat(dim=1)) for one row tile."""
    c1 = x_ref.shape[-1]
    o_ref[:, :c1] = x_ref[...]
    o_ref[:, c1:] = xs_ref[...]


def _pick_row_tile(n_rows: int, c_out: int, itemsize: int) -> int:
    """Row tile: multiple of 8 (f32 sublanes), big enough to amortize the
    ~0.35us/grid-step overhead, small enough to stay well inside every
    generation's scoped VMEM (v5e 16 MiB default ... v7x 64 MiB physical)."""
    budget = 8 * 1024 * 1024                      # conservative working-set budget
    per_row = 4 * c_out * itemsize                # in + out tiles, double-buffered
    tile = budget // max(per_row, 1)
    tile = max(8, min(tile, 2048))
    tile = (tile // 8) * 8
    n_rounded = ((n_rows + 7) // 8) * 8
    return min(tile, n_rounded)


def concat_skip_pallas(x, x_skip, *, row_tile=None):
    """Pallas implementation of `torch.cat([x, x_skip], dim=1)` over point rows."""
    if x.ndim != 2 or x_skip.ndim != 2 or x.shape[0] != x_skip.shape[0]:
        raise ValueError("x and x_skip must both be [N, C] with matching N")
    n, c1 = x.shape
    _, c2 = x_skip.shape
    c_out = c1 + c2

    dtype = jnp.promote_types(x.dtype, x_skip.dtype)
    x = x.astype(dtype)
    x_skip = x_skip.astype(dtype)
    itemsize = np.dtype(dtype).itemsize

    tile = row_tile if row_tile is not None else _pick_row_tile(n, c_out, itemsize)
    tile = max(8, (tile // 8) * 8)
    n_pad = pl.cdiv(n, tile) * tile
    if n_pad != n:
        x = jnp.pad(x, ((0, n_pad - n), (0, 0)))
        x_skip = jnp.pad(x_skip, ((0, n_pad - n), (0, 0)))

    out = pl.pallas_call(
        _concat_rows_kernel,
        out_shape=jax.ShapeDtypeStruct((n_pad, c_out), dtype),
        grid_spec=pltpu.PrefetchScalarGridSpec(
            num_scalar_prefetch=0,
            grid=(n_pad // tile,),
            in_specs=[
                pl.BlockSpec((tile, c1), lambda i: (i, 0)),
                pl.BlockSpec((tile, c2), lambda i: (i, 0)),
            ],
            out_specs=pl.BlockSpec((tile, c_out), lambda i: (i, 0)),
        ),
        compiler_params=pltpu.CompilerParams(
            dimension_semantics=("parallel",),
            vmem_limit_bytes=32 * 1024 * 1024,
        ),
        cost_estimate=pl.CostEstimate(
            flops=0,
            transcendentals=0,
            bytes_accessed=2 * n_pad * c_out * itemsize,   # read x + x_skip, write out
        ),
    )(x, x_skip)
    return out[:n]


def base_convolution_up_forward(data, data_skip, *, skip=True):
    """Python mirror of BaseConvolutionUp.forward on dict-based 'Batch' objects."""
    x = data["x"]
    x_skip = data_skip.get("x", None)
    # TODO(synk): abstract self.conv(x, pos, pos_skip, batch, batch_skip, edge_index)
    # is treated as identity; edge_index from the abstract neighbour_finder is unused.
    if x_skip is not None and skip:
        x = concat_skip_pallas(x, x_skip, row_tile=256)
    batch_obj = {"x": x}
    # copy_from_to(data_skip, batch_obj): copy keys not already present.
    for key, val in data_skip.items():
        batch_obj.setdefault(key, val)
    return batch_obj


if __name__ == "__main__":
    key = jax.random.PRNGKey(0)
    k_up, k_skip, k_pos = jax.random.split(key, 3)

    # Small point cloud: N points, lane-dense (multiple-of-128) channel widths.
    n_points, c_up, c_skip = 1000, 128, 128
    pos = jax.random.normal(k_pos, (n_points, 3), dtype=jnp.float32)
    batch_idx = jnp.zeros((n_points,), dtype=jnp.int32)

    data = {
        "x": jax.random.normal(k_up, (n_points, c_up), dtype=jnp.float32),
        "pos": pos,
        "batch": batch_idx,
    }
    data_skip = {
        "x": jax.random.normal(k_skip, (n_points, c_skip), dtype=jnp.float32),
        "pos": pos,
        "batch": batch_idx,
    }

    out = base_convolution_up_forward(data, data_skip)
    result = jax.block_until_ready(out["x"])

    # Reference: torch.cat([conv(x)=x, x_skip], dim=1)
    ref = jnp.concatenate([data["x"], data_skip["x"]], axis=1)
    assert result.shape == (n_points, c_up + c_skip)
    np.testing.assert_array_equal(np.asarray(result), np.asarray(ref))
    assert "pos" in out and "batch" in out   # copy_from_to semantics

    print("KERNEL_OK")
</pallas_src>

<mosaic_0001>
module attributes {stable_mosaic.version = 11 : i64} {
  func.func @_concat_rows_kernel(%arg0: i32, %arg1: memref<256x128xf32, #tpu.memory_space<vmem>>, %arg2: memref<256x128xf32, #tpu.memory_space<vmem>>, %arg3: memref<256x256xf32, #tpu.memory_space<vmem>>) attributes {dimension_semantics = [#tpu.dimension_semantics<parallel>], iteration_bounds = array<i64: 4>, scalar_prefetch = 0 : i64, scratch_operands = 0 : i64, tpu.core_type = #tpu.core_type<tc>, window_params = [{transform_indices = @transform_0, window_bounds = array<i64: 256, 128>}, {transform_indices = @transform_1, window_bounds = array<i64: 256, 128>}, {transform_indices = @transform_2, window_bounds = array<i64: 256, 256>}]} {
    %c0 = arith.constant 0 : index
    %c0_0 = arith.constant 0 : index
    %0 = vector.load %arg1[%c0, %c0_0] : memref<256x128xf32, #tpu.memory_space<vmem>>, vector<256x128xf32>
    %c0_1 = arith.constant 0 : index
    %c0_2 = arith.constant 0 : index
    %1 = vector.load %arg3[%c0_1, %c0_2] : memref<256x256xf32, #tpu.memory_space<vmem>>, vector<256x128xf32>
    tpu.vector_store %arg3[%c0_1, %c0_2], %0 {strides = array<i32>} : memref<256x256xf32, #tpu.memory_space<vmem>>, vector<256x128xf32>,
    %c0_3 = arith.constant 0 : index
    %c0_4 = arith.constant 0 : index
    %2 = vector.load %arg2[%c0_3, %c0_4] : memref<256x128xf32, #tpu.memory_space<vmem>>, vector<256x128xf32>
    %c0_5 = arith.constant 0 : index
    %c128 = arith.constant 128 : index
    %3 = vector.load %arg3[%c0_5, %c128] : memref<256x256xf32, #tpu.memory_space<vmem>>, vector<256x128xf32>
    tpu.vector_store %arg3[%c0_5, %c128], %2 {strides = array<i32>} : memref<256x256xf32, #tpu.memory_space<vmem>>, vector<256x128xf32>,
    return
  }
  func.func @transform_0(%arg0: i32) -> (i32, i32) {
    %c0_i32 = arith.constant 0 : i32
    %c0_i32_0 = arith.constant 0 : i32
    return %arg0, %c0_i32 : i32, i32
  }
  func.func @transform_1(%arg0: i32) -> (i32, i32) {
    %c0_i32 = arith.constant 0 : i32
    %c0_i32_0 = arith.constant 0 : i32
    return %arg0, %c0_i32 : i32, i32
  }
  func.func @transform_2(%arg0: i32) -> (i32, i32) {
    %c0_i32 = arith.constant 0 : i32
    %c0_i32_0 = arith.constant 0 : i32
    return %arg0, %c0_i32 : i32, i32
  }
}

</mosaic_0001>

<llo_original>
// kernel: tpu_custom_call.1
$region0: #{tpu_custom_call.1}
  #allocation0 [shape = 'u32[]', space=smem, size = 0x4, offset = 0x4, fixed_abs, tag = 'smem constant byte address 0x4 - core index']
  #allocation1 [shape = 'u32[72,128]{1,0:T(1,128)}', space=vmem, size = 0x9000, scoped, tag = 'internal scratch']
  %s0 = inlined_call_operand.hbm [shape: f32[1024,128], index: 0, kind: input, shape index: {}]
  %s1 = inlined_call_operand.hbm [shape: f32[1024,128], index: 1, kind: input, shape index: {}]
  %s2 = inlined_call_operand.hbm [shape: f32[1024,256], index: 2, kind: output, shape index: {}]
  %s3 = sld [smem:[#allocation0]]
  $region49: #{tpu_custom_call.1} parent=0
    _
  %s5 = ssub.s32 1, %s3
  %s6 = scalar_select 0, %s5, %s3
  $region1: #{tpu_custom_call.1} parent=0
    #allocation2 [shape = 'u8[262144]{0}', space=vmem, size = 0x40000, scoped, tag = 'input window, operand 0']
    #allocation3 [shape = 's32[2]{0}', space=sflag, size = 0x8, scoped, tag = 'scoped memory for tpu_custom_call.1']
    #allocation4 [shape = 's32[2]{0}', space=sflag, size = 0x8, scoped, tag = 'scoped memory for tpu_custom_call.1']
    #allocation5 [shape = 'u8[262144]{0}', space=vmem, size = 0x40000, scoped, tag = 'input window, operand 1']
    #allocation6 [shape = 's32[2]{0}', space=sflag, size = 0x8, scoped, tag = 'scoped memory for tpu_custom_call.1']
    #allocation7 [shape = 'u8[524288]{0}', space=vmem, size = 0x80000, scoped, tag = 'output window, operand 0']
    %7 = vsyncpa [#allocation3], 0
    %s8 = scalar_lea.sflag [#allocation3], 1
    %9 = vsyncpa %s8, 0
    %10 = vsyncpa [#allocation6], 0
    %s11 = scalar_lea.sflag [#allocation6], 1
    %12 = vsyncpa %s11, 0
    %13 = vsyncpa [#allocation4], 0
    %s14 = scalar_lea.sflag [#allocation4], 1
    %15 = vsyncpa %s14, 0
    loop: start=0, step=1, limit=6
    $region2: #{tpu_custom_call.1} parent=1 // loop_pre_header
      _
    $region3: #{tpu_custom_call.1} parent=1 // loop_header
      %s17 = sphi 0, %s21
      %p18 = scmp.ge.s32.totalorder %s17, 6
      %s27 = sphi 0, %s29
      %s30 = sphi 0, %s27
      %s31 = sphi 0, %s30
      %s47 = sphi 0, %s31
      %s53 = sphi 0, %s55
      %s56 = sphi 0, %s53
      %s57 = sphi 0, %s56
      %s73 = sphi 0, %s57
      %s79 = sphi 0, %s81
      %s82 = sphi 0, %s79
      %s83 = sphi 0, %s82
      %s99 = sphi 0, %s83
    $region4: #{tpu_custom_call.1} parent=1 // loop_header_branch
      %20 = sbr.rel (%p18) target = $region8
    $region5: #{tpu_custom_call.1} parent=1 // loop_body
      %s22 = ssub.s32 %s17, 1
      %s23 = ssub.s32 %s17, 2
      %s24 = sadd.s32 %s17, 1
      %s25 = ssub.s32 %s17, %s24
      %p26 = scmp.eq.s32.totalorder %s25, 0
      %s28 = sadd.s32 %s27, 1
      %s29 = scalar_select %p26, %s27, %s28
      %p32 = pneg %p26
      %p33 = scmp.eq.s32.totalorder %s17, 3
      %p34 = por %p32, %p33
      %p35 = scmp.ne.s32.totalorder %s27, %s30
      %p36 = scmp.eq.s32.totalorder %s17, 0
      %p37 = por %p35, %p36
      %p38 = scmp.ne.s32.totalorder %s27, %s30
      %p39 = scmp.eq.s32.totalorder %s22, 3
      %p40 = por %p38, %p39
      %p41 = scmp.ne.s32.totalorder %s30, %s31
      %p42 = scmp.eq.s32.totalorder %s22, 0
      %p43 = por %p41, %p42
      %p44 = scmp.ne.s32.totalorder %s30, %s31
      %p45 = scmp.eq.s32.totalorder %s23, 3
      %p46 = por %p44, %p45
      %p48 = scmp.ne.s32.totalorder %s31, %s47
      %p49 = scmp.eq.s32.totalorder %s23, 0
      %p50 = por %p48, %p49
      %s51 = ssub.s32 %s17, %s24
      %p52 = scmp.eq.s32.totalorder %s51, 0
      %s54 = sadd.s32 %s53, 1
      %s55 = scalar_select %p52, %s53, %s54
      %p58 = pneg %p52
      %p59 = scmp.eq.s32.totalorder %s17, 3
      %p60 = por %p58, %p59
      %p61 = scmp.ne.s32.totalorder %s53, %s56
      %p62 = scmp.eq.s32.totalorder %s17, 0
      %p63 = por %p61, %p62
      %p64 = scmp.ne.s32.totalorder %s53, %s56
      %p65 = scmp.eq.s32.totalorder %s22, 3
      %p66 = por %p64, %p65
      %p67 = scmp.ne.s32.totalorder %s56, %s57
      %p68 = scmp.eq.s32.totalorder %s22, 0
      %p69 = por %p67, %p68
      %p70 = scmp.ne.s32.totalorder %s56, %s57
      %p71 = scmp.eq.s32.totalorder %s23, 3
      %p72 = por %p70, %p71
      %p74 = scmp.ne.s32.totalorder %s57, %s73
      %p75 = scmp.eq.s32.totalorder %s23, 0
      %p76 = por %p74, %p75
      %s77 = ssub.s32 %s17, %s24
      %p78 = scmp.eq.s32.totalorder %s77, 0
      %s80 = sadd.s32 %s79, 1
      %s81 = scalar_select %p78, %s79, %s80
      %p84 = pneg %p78
      %p85 = scmp.eq.s32.totalorder %s17, 3
      %p86 = por %p84, %p85
      %p87 = scmp.ne.s32.totalorder %s79, %s82
      %p88 = scmp.eq.s32.totalorder %s17, 0
      %p89 = por %p87, %p88
      %p90 = scmp.ne.s32.totalorder %s79, %s82
      %p91 = scmp.eq.s32.totalorder %s22, 3
      %p92 = por %p90, %p91
      %p93 = scmp.ne.s32.totalorder %s82, %s83
      %p94 = scmp.eq.s32.totalorder %s22, 0
      %p95 = por %p93, %p94
      %p96 = scmp.ne.s32.totalorder %s82, %s83
      %p97 = scmp.eq.s32.totalorder %s23, 3
      %p98 = por %p96, %p97
      %p100 = scmp.ne.s32.totalorder %s83, %s99
      %p101 = scmp.eq.s32.totalorder %s23, 0
      %p102 = por %p100, %p101
      %p103 = scmp.le.s32.totalorder 1, %s17
      %p104 = scmp.lt.s32.totalorder %s17, 5
      %p105 = pnand %p103, %p104
      %p106 = pneg %p105
      // Predicated region
      $region9: #{tpu_custom_call.1} parent=5 // pred_check
        _
      $region10: #{tpu_custom_call.1} parent=5 // pred_check_branch
        %108 = sbr.rel (%p105) target = $region12
      $region11: #{tpu_custom_call.1} parent=5 // pred_region
        %s109 = ssub.s32 %s17, 1
      $region12: #{tpu_custom_call.1} parent=5 // pred_fallthru
        _
      %p110 = scmp.lt.s32.totalorder %s17, 4
      // Predicated region
      $region13: #{tpu_custom_call.1} parent=5 // pred_check
        %p111 = pneg %p110
      $region14: #{tpu_custom_call.1} parent=5 // pred_check_branch
        %113 = sbr.rel (%p111) target = $region16
      $region15: #{tpu_custom_call.1} parent=5 // pred_region
        // Predicated region
        $region17: #{tpu_custom_call.1} parent=15 // pred_check
          %p114 = pneg %p37
        $region18: #{tpu_custom_call.1} parent=15 // pred_check_branch
          %116 = sbr.rel (%p114) target = $region20
        $region19: #{tpu_custom_call.1} parent=15 // pred_region
          %s117 = sand.u32 %s27, 1
          %s118 = scalar_lea.sflag [#allocation3], %s117
          %s119 = sand.u32 %s27, 1
          %s120 = smul.addr %s119, 256
          %s121 = scalar_lea.vmem [#allocation2], %s120
          %s122 = smul.u32 32, %s17
          %124 = vsyncadd %s118, 0
          %s125 = smul.addr %s122, 8
          %s126 = scalar_lea.hbm %s0, %s125
          %s127 = sshll.u32 %s126, 4
          %s128 = int_to_ptr.hbm [resolvable:$true] %s127
          %s129 = sshll.u32 %s121, 4
          %s130 = int_to_ptr.vmem [resolvable:$true] %s129
          %135 = dma.hbm_to_vmem [thread:$0]  %s128, 4096, %s130, %s118, 128, 128, 8
        $region20: #{tpu_custom_call.1} parent=15 // pred_fallthru
          _
        // Predicated region
        $region21: #{tpu_custom_call.1} parent=15 // pred_check
          %p136 = pneg %p63
        $region22: #{tpu_custom_call.1} parent=15 // pred_check_branch
          %138 = sbr.rel (%p136) target = $region24
        $region23: #{tpu_custom_call.1} parent=15 // pred_region
          %s139 = sand.u32 %s53, 1
          %s140 = scalar_lea.sflag [#allocation6], %s139
          %s141 = sand.u32 %s53, 1
          %s142 = smul.addr %s141, 256
          %s143 = scalar_lea.vmem [#allocation5], %s142
          %s144 = smul.u32 32, %s17
          %146 = vsyncadd %s140, 0
          %s147 = smul.addr %s144, 8
          %s148 = scalar_lea.hbm %s1, %s147
          %s149 = sshll.u32 %s148, 4
          %s150 = int_to_ptr.hbm [resolvable:$true] %s149
          %s151 = sshll.u32 %s143, 4
          %s152 = int_to_ptr.vmem [resolvable:$true] %s151
          %157 = dma.hbm_to_vmem [thread:$0]  %s150, 4096, %s152, %s140, 128, 128, 8
        $region24: #{tpu_custom_call.1} parent=15 // pred_fallthru
          _
      $region16: #{tpu_custom_call.1} parent=5 // pred_fallthru
        _
      %p158 = scmp.le.s32.totalorder 1, %s17
      %p159 = scmp.lt.s32.totalorder %s17, 5
      %p160 = pnand %p158, %p159
      %p161 = pneg %p160
      // Predicated region
      $region25: #{tpu_custom_call.1} parent=5 // pred_check
        _
      $region26: #{tpu_custom_call.1} parent=5 // pred_check_branch
        %163 = sbr.rel (%p160) target = $region28
      $region27: #{tpu_custom_call.1} parent=5 // pred_region
        %s164 = ssub.s32 %s17, 1
        %s165 = sand.u32 %s30, 1
        %s166 = scalar_lea.sflag [#allocation3], %s165
        %s167 = sand.u32 %s30, 1
        %s168 = smul.addr %s167, 256
        %s169 = scalar_lea.vmem [#allocation2], %s168
        // Predicated region
        $region29: #{tpu_custom_call.1} parent=27 // pred_check
          %p170 = pneg %p43
        $region30: #{tpu_custom_call.1} parent=27 // pred_check_branch
          %172 = sbr.rel (%p170) target = $region32
        $region31: #{tpu_custom_call.1} parent=27 // pred_region
          %174 = dma.done %s166, 4096
        $region32: #{tpu_custom_call.1} parent=27 // pred_fallthru
          _
        %s175 = sand.u32 %s56, 1
        %s176 = scalar_lea.sflag [#allocation6], %s175
        %s177 = sand.u32 %s56, 1
        %s178 = smul.addr %s177, 256
        %s179 = scalar_lea.vmem [#allocation5], %s178
        // Predicated region
        $region33: #{tpu_custom_call.1} parent=27 // pred_check
          %p180 = pneg %p69
        $region34: #{tpu_custom_call.1} parent=27 // pred_check_branch
          %182 = sbr.rel (%p180) target = $region36
        $region35: #{tpu_custom_call.1} parent=27 // pred_region
          %184 = dma.done %s176, 4096
        $region36: #{tpu_custom_call.1} parent=27 // pred_fallthru
          _
        %s185 = sand.u32 %s30, 1
        %s186 = scalar_lea.sflag [#allocation3], %s185
        %s187 = sand.u32 %s30, 1
        %s188 = smul.addr %s187, 256
        %s189 = scalar_lea.vmem [#allocation2], %s188
        %p190 = pneg %p43
        %p191 = pneg %p40
        %s192 = sand.u32 %s56, 1
        %s193 = scalar_lea.sflag [#allocation6], %s192
        %s194 = sand.u32 %s56, 1
        %s195 = smul.addr %s194, 256
        %s196 = scalar_lea.vmem [#allocation5], %s195
        %p197 = pneg %p69
        %p198 = pneg %p66
        %p199 = pneg %p95
        %p200 = pneg %p92
        %s201 = sand.u32 %s82, 1
        %s202 = scalar_lea.sflag [#allocation4], %s201
        %s203 = sand.u32 %s82, 1
        %s204 = smul.addr %s203, 512
        %s205 = scalar_lea.vmem [#allocation7], %s204
        %s206 = smul.u32 32, %s22
        %s207 = smul.u32 32, %s22
        %s208 = smul.u32 32, %s22
        %v209 = vld [vmem:[%s169] sm:$0xff]
        %v210 = vld [vmem:[%s169 + $0x8] sm:$0xff]
        %v211 = vld [vmem:[%s169 + $0x10] sm:$0xff]
        %v212 = vld [vmem:[%s169 + $0x18] sm:$0xff]
        %v213 = vld [vmem:[%s169 + $0x20] sm:$0xff]
        %v214 = vld [vmem:[%s169 + $0x28] sm:$0xff]
        %v215 = vld [vmem:[%s169 + $0x30] sm:$0xff]
        %v216 = vld [vmem:[%s169 + $0x38] sm:$0xff]
        %v217 = vld [vmem:[%s169 + $0x40] sm:$0xff]
        %v218 = vld [vmem:[%s169 + $0x48] sm:$0xff]
        %v219 = vld [vmem:[%s169 + $0x50] sm:$0xff]
        %v220 = vld [vmem:[%s169 + $0x58] sm:$0xff]
        %v221 = vld [vmem:[%s169 + $0x60] sm:$0xff]
        %v222 = vld [vmem:[%s169 + $0x68] sm:$0xff]
        %v223 = vld [vmem:[%s169 + $0x70] sm:$0xff]
        %v224 = vld [vmem:[%s169 + $0x78] sm:$0xff]
        %v225 = vld [vmem:[%s169 + $0x80] sm:$0xff]
        %v226 = vld [vmem:[%s169 + $0x88] sm:$0xff]
        %v227 = vld [vmem:[%s169 + $0x90] sm:$0xff]
        %v228 = vld [vmem:[%s169 + $0x98] sm:$0xff]
        %v229 = vld [vmem:[%s169 + $0xa0] sm:$0xff]
        %v230 = vld [vmem:[%s169 + $0xa8] sm:$0xff]
        %v231 = vld [vmem:[%s169 + $0xb0] sm:$0xff]
        %v232 = vld [vmem:[%s169 + $0xb8] sm:$0xff]
        %v233 = vld [vmem:[%s169 + $0xc0] sm:$0xff]
        %v234 = vld [vmem:[%s169 + $0xc8] sm:$0xff]
        %v235 = vld [vmem:[%s169 + $0xd0] sm:$0xff]
        %v236 = vld [vmem:[%s169 + $0xd8] sm:$0xff]
        %v237 = vld [vmem:[%s169 + $0xe0] sm:$0xff]
        %v238 = vld [vmem:[%s169 + $0xe8] sm:$0xff]
        %v239 = vld [vmem:[%s169 + $0xf0] sm:$0xff]
        %v240 = vld [vmem:[%s169 + $0xf8] sm:$0xff]
        %241 = vst [vmem:[%s205] sm:$0xff] %v209
        %242 = vst [vmem:[%s205 + $0x10] sm:$0xff] %v210
        %243 = vst [vmem:[%s205 + $0x20] sm:$0xff] %v211
        %244 = vst [vmem:[%s205 + $0x30] sm:$0xff] %v212
        %245 = vst [vmem:[%s205 + $0x40] sm:$0xff] %v213
        %246 = vst [vmem:[%s205 + $0x50] sm:$0xff] %v214
        %247 = vst [vmem:[%s205 + $0x60] sm:$0xff] %v215
        %248 = vst [vmem:[%s205 + $0x70] sm:$0xff] %v216
        %249 = vst [vmem:[%s205 + $0x80] sm:$0xff] %v217
        %250 = vst [vmem:[%s205 + $0x90] sm:$0xff] %v218
        %251 = vst [vmem:[%s205 + $0xa0] sm:$0xff] %v219
        %252 = vst [vmem:[%s205 + $0xb0] sm:$0xff] %v220
        %253 = vst [vmem:[%s205 + $0xc0] sm:$0xff] %v221
        %254 = vst [vmem:[%s205 + $0xd0] sm:$0xff] %v222
        %255 = vst [vmem:[%s205 + $0xe0] sm:$0xff] %v223
        %256 = vst [vmem:[%s205 + $0xf0] sm:$0xff] %v224
        %257 = vst [vmem:[%s205 + $0x100] sm:$0xff] %v225
        %258 = vst [vmem:[%s205 + $0x110] sm:$0xff] %v226
        %259 = vst [vmem:[%s205 + $0x120] sm:$0xff] %v227
        %260 = vst [vmem:[%s205 + $0x130] sm:$0xff] %v228
        %261 = vst [vmem:[%s205 + $0x140] sm:$0xff] %v229
        %262 = vst [vmem:[%s205 + $0x150] sm:$0xff] %v230
        %263 = vst [vmem:[%s205 + $0x160] sm:$0xff] %v231
        %264 = vst [vmem:[%s205 + $0x170] sm:$0xff] %v232
        %265 = vst [vmem:[%s205 + $0x180] sm:$0xff] %v233
        %266 = vst [vmem:[%s205 + $0x190] sm:$0xff] %v234
        %267 = vst [vmem:[%s205 + $0x1a0] sm:$0xff] %v235
        %268 = vst [vmem:[%s205 + $0x1b0] sm:$0xff] %v236
        %269 = vst [vmem:[%s205 + $0x1c0] sm:$0xff] %v237
        %270 = vst [vmem:[%s205 + $0x1d0] sm:$0xff] %v238
        %271 = vst [vmem:[%s205 + $0x1e0] sm:$0xff] %v239
        %272 = vst [vmem:[%s205 + $0x1f0] sm:$0xff] %v240
        %v273 = vld [vmem:[%s179] sm:$0xff]
        %v274 = vld [vmem:[%s179 + $0x8] sm:$0xff]
        %v275 = vld [vmem:[%s179 + $0x10] sm:$0xff]
        %v276 = vld [vmem:[%s179 + $0x18] sm:$0xff]
        %v277 = vld [vmem:[%s179 + $0x20] sm:$0xff]
        %v278 = vld [vmem:[%s179 + $0x28] sm:$0xff]
        %v279 = vld [vmem:[%s179 + $0x30] sm:$0xff]
        %v280 = vld [vmem:[%s179 + $0x38] sm:$0xff]
        %v281 = vld [vmem:[%s179 + $0x40] sm:$0xff]
        %v282 = vld [vmem:[%s179 + $0x48] sm:$0xff]
        %v283 = vld [vmem:[%s179 + $0x50] sm:$0xff]
        %v284 = vld [vmem:[%s179 + $0x58] sm:$0xff]
        %v285 = vld [vmem:[%s179 + $0x60] sm:$0xff]
        %v286 = vld [vmem:[%s179 + $0x68] sm:$0xff]
        %v287 = vld [vmem:[%s179 + $0x70] sm:$0xff]
        %v288 = vld [vmem:[%s179 + $0x78] sm:$0xff]
        %v289 = vld [vmem:[%s179 + $0x80] sm:$0xff]
        %v290 = vld [vmem:[%s179 + $0x88] sm:$0xff]
        %v291 = vld [vmem:[%s179 + $0x90] sm:$0xff]
        %v292 = vld [vmem:[%s179 + $0x98] sm:$0xff]
        %v293 = vld [vmem:[%s179 + $0xa0] sm:$0xff]
        %v294 = vld [vmem:[%s179 + $0xa8] sm:$0xff]
        %v295 = vld [vmem:[%s179 + $0xb0] sm:$0xff]
        %v296 = vld [vmem:[%s179 + $0xb8] sm:$0xff]
        %v297 = vld [vmem:[%s179 + $0xc0] sm:$0xff]
        %v298 = vld [vmem:[%s179 + $0xc8] sm:$0xff]
        %v299 = vld [vmem:[%s179 + $0xd0] sm:$0xff]
        %v300 = vld [vmem:[%s179 + $0xd8] sm:$0xff]
        %v301 = vld [vmem:[%s179 + $0xe0] sm:$0xff]
        %v302 = vld [vmem:[%s179 + $0xe8] sm:$0xff]
        %v303 = vld [vmem:[%s179 + $0xf0] sm:$0xff]
        %v304 = vld [vmem:[%s179 + $0xf8] sm:$0xff]
        %305 = vst [vmem:[%s205 + $0x8] sm:$0xff] %v273
        %306 = vst [vmem:[%s205 + $0x18] sm:$0xff] %v274
        %307 = vst [vmem:[%s205 + $0x28] sm:$0xff] %v275
        %308 = vst [vmem:[%s205 + $0x38] sm:$0xff] %v276
        %309 = vst [vmem:[%s205 + $0x48] sm:$0xff] %v277
        %310 = vst [vmem:[%s205 + $0x58] sm:$0xff] %v278
        %311 = vst [vmem:[%s205 + $0x68] sm:$0xff] %v279
        %312 = vst [vmem:[%s205 + $0x78] sm:$0xff] %v280
        %313 = vst [vmem:[%s205 + $0x88] sm:$0xff] %v281
        %314 = vst [vmem:[%s205 + $0x98] sm:$0xff] %v282
        %315 = vst [vmem:[%s205 + $0xa8] sm:$0xff] %v283
        %316 = vst [vmem:[%s205 + $0xb8] sm:$0xff] %v284
        %317 = vst [vmem:[%s205 + $0xc8] sm:$0xff] %v285
        %318 = vst [vmem:[%s205 + $0xd8] sm:$0xff] %v286
        %319 = vst [vmem:[%s205 + $0xe8] sm:$0xff] %v287
        %320 = vst [vmem:[%s205 + $0xf8] sm:$0xff] %v288
        %321 = vst [vmem:[%s205 + $0x108] sm:$0xff] %v289
        %322 = vst [vmem:[%s205 + $0x118] sm:$0xff] %v290
        %323 = vst [vmem:[%s205 + $0x128] sm:$0xff] %v291
        %324 = vst [vmem:[%s205 + $0x138] sm:$0xff] %v292
        %325 = vst [vmem:[%s205 + $0x148] sm:$0xff] %v293
        %326 = vst [vmem:[%s205 + $0x158] sm:$0xff] %v294
        %327 = vst [vmem:[%s205 + $0x168] sm:$0xff] %v295
        %328 = vst [vmem:[%s205 + $0x178] sm:$0xff] %v296
        %329 = vst [vmem:[%s205 + $0x188] sm:$0xff] %v297
        %330 = vst [vmem:[%s205 + $0x198] sm:$0xff] %v298
        %331 = vst [vmem:[%s205 + $0x1a8] sm:$0xff] %v299
        %332 = vst [vmem:[%s205 + $0x1b8] sm:$0xff] %v300
        %333 = vst [vmem:[%s205 + $0x1c8] sm:$0xff] %v301
        %334 = vst [vmem:[%s205 + $0x1d8] sm:$0xff] %v302
        %335 = vst [vmem:[%s205 + $0x1e8] sm:$0xff] %v303
        %336 = vst [vmem:[%s205 + $0x1f8] sm:$0xff] %v304
        %s337 = sand.u32 %s82, 1
        %s338 = scalar_lea.sflag [#allocation4], %s337
        %s339 = sand.u32 %s82, 1
        %s340 = smul.addr %s339, 512
        %s341 = scalar_lea.vmem [#allocation7], %s340
        // Predicated region
        $region37: #{tpu_custom_call.1} parent=27 // pred_check
          %p342 = pneg %p92
        $region38: #{tpu_custom_call.1} parent=27 // pred_check_branch
          %344 = sbr.rel (%p342) target = $region40
        $region39: #{tpu_custom_call.1} parent=27 // pred_region
          %s345 = smul.u32 32, %s22
          %347 = vsyncadd %s338, 0
          %s348 = smul.addr %s345, 2
          %s349 = smul.addr %s348, 8
          %s350 = scalar_lea.hbm %s2, %s349
          %s351 = sshll.u32 %s341, 4
          %s352 = int_to_ptr.vmem [resolvable:$true] %s351
          %s353 = sshll.u32 %s350, 4
          %s354 = int_to_ptr.hbm [resolvable:$true] %s353
          %359 = dma.vmem_to_hbm [thread:$0]  %s352, 8192, %s354, %s338, 256, 256, 16
        $region40: #{tpu_custom_call.1} parent=27 // pred_fallthru
          _
      $region28: #{tpu_custom_call.1} parent=5 // pred_fallthru
        _
      %p360 = scmp.le.s32.totalorder 2, %s17
      // Predicated region
      $region41: #{tpu_custom_call.1} parent=5 // pred_check
        %p361 = pneg %p360
      $region42: #{tpu_custom_call.1} parent=5 // pred_check_branch
        %363 = sbr.rel (%p361) target = $region44
      $region43: #{tpu_custom_call.1} parent=5 // pred_region
        %s364 = ssub.s32 %s17, 2
        // Predicated region
        $region45: #{tpu_custom_call.1} parent=43 // pred_check
          %p365 = pneg %p98
        $region46: #{tpu_custom_call.1} parent=43 // pred_check_branch
          %367 = sbr.rel (%p365) target = $region48
        $region47: #{tpu_custom_call.1} parent=43 // pred_region
          %s368 = sand.u32 %s83, 1
          %s369 = scalar_lea.sflag [#allocation4], %s368
          %s370 = sand.u32 %s83, 1
          %s371 = smul.addr %s370, 512
          %s372 = scalar_lea.vmem [#allocation7], %s371
          %374 = dma.done %s369, 8192
        $region48: #{tpu_custom_call.1} parent=43 // pred_fallthru
          _
      $region44: #{tpu_custom_call.1} parent=5 // pred_fallthru
        _
    $region6: #{tpu_custom_call.1} parent=1 // loop_footer
      %s21 = sadd.s32 1, %s17
    $region7: #{tpu_custom_call.1} parent=1 // loop_footer_branch
      %16 = sbr.rel target = $region3
    $region8: #{tpu_custom_call.1} parent=1 // loop_exit
      _
    %375 = vsyncpa [#allocation3], 1
    %s376 = scalar_lea.sflag [#allocation3], 1
    %377 = vsyncpa %s376, 1
    %378 = vsyncpa [#allocation6], 1
    %s379 = scalar_lea.sflag [#allocation6], 1
    %380 = vsyncpa %s379, 1
    %381 = vsyncpa [#allocation4], 1
    %s382 = scalar_lea.sflag [#allocation4], 1
    %383 = vsyncpa %s382, 1

</llo_original>
